<compile_context>
chip_gen: v7x
topology: tpu7x:2x2x1
jax: 0.10.0
libtpu: 0.0.40
codegen_flags: <defaults>
</compile_context>

<pallas_src>
import jax
import jax.numpy as jnp
from jax.experimental import pallas as pl
from jax.experimental.pallas import tpu as pltpu

EPS = 1e-5
INV_SQRT2 = 0.7071067811865476
LANES = 128  # lane width of the packed parameter slab


def _round_up(n, m):
    return (n + m - 1) // m * m


def _bn_train_gelu(h, gamma, beta):
    """Training-mode BatchNorm (batch stats, biased var) followed by exact GELU."""
    mean = jnp.mean(h, axis=0, keepdims=True)
    centered = h - mean
    var = jnp.mean(centered * centered, axis=0, keepdims=True)
    scale = gamma * jax.lax.rsqrt(var + EPS)      # fold gamma into the scale
    h = centered * scale + beta
    # nn.GELU() default: 0.5 * x * (1 + erf(x / sqrt(2)))
    return 0.5 * h * (1.0 + jax.lax.erf(h * INV_SQRT2))


def _make_kernel(D, H, out_dims, w2_off, w3_off, sp_off):
    """Build the kernel with all slab offsets / sizes baked in as static ints."""

    def kernel(x_ref, slab_ref, o_ref):
        # Static, sublane-aligned slices of the single packed parameter slab
        # (ref views are free; only the sliced windows are actually loaded).
        w1 = slab_ref[0:D, 0:H]                          # (D, H)
        w2 = slab_ref[w2_off:w2_off + H, 0:H]            # (H, H)
        w3 = slab_ref[w3_off:w3_off + H, 0:out_dims]     # (H, out_dims)
        g1 = slab_ref[sp_off + 0:sp_off + 1, 0:H]
        be1 = slab_ref[sp_off + 1:sp_off + 2, 0:H]
        g2 = slab_ref[sp_off + 2:sp_off + 3, 0:H]
        be2 = slab_ref[sp_off + 3:sp_off + 4, 0:H]
        b3 = slab_ref[sp_off + 4:sp_off + 5, 0:out_dims]

        x = x_ref[...]

        # --- block 1: Linear (bias cancelled by BN) -> BN -> GELU ---
        h = jnp.dot(x, w1, preferred_element_type=jnp.float32)
        h = _bn_train_gelu(h, g1, be1)

        # --- block 2: Linear (bias cancelled by BN) -> BN -> GELU ---
        h = jnp.dot(h, w2, preferred_element_type=jnp.float32)
        h = _bn_train_gelu(h, g2, be2)

        # --- head: Linear; emit (B, out_dims) directly (one masked vst) ---
        out = jnp.dot(h, w3, preferred_element_type=jnp.float32) + b3
        o_ref[...] = out.astype(o_ref.dtype)

    return kernel


def pack_params(params):
    """One-time packing of every constant operand into a single (rows, 128) f32
    slab. Segment row offsets are multiples of 8 (sublane-aligned):
        rows [0, D)                 : w1
        rows [w2_off, w2_off + H)   : w2
        rows [w3_off, w3_off + H)   : w3
        rows [sp_off, sp_off + 8)   : gamma1, beta1, gamma2, beta2, b3
    Cuts the per-call input DMA count from 5 to 2 (x + slab)."""
    D, H = params["w1"].shape
    out_dims = params["w3"].shape[1]
    assert H <= LANES and out_dims <= LANES

    w2_off = _round_up(D, 8)
    w3_off = w2_off + _round_up(H, 8)
    sp_off = w3_off + _round_up(H, 8)
    rows = sp_off + 8

    slab = jnp.zeros((rows, LANES), jnp.float32)
    slab = slab.at[0:D, 0:H].set(params["w1"])
    slab = slab.at[w2_off:w2_off + H, 0:H].set(params["w2"])
    slab = slab.at[w3_off:w3_off + H, 0:out_dims].set(params["w3"])
    slab = slab.at[sp_off + 0, 0:H].set(params["gamma1"][0])
    slab = slab.at[sp_off + 1, 0:H].set(params["beta1"][0])
    slab = slab.at[sp_off + 2, 0:H].set(params["gamma2"][0])
    slab = slab.at[sp_off + 3, 0:H].set(params["beta2"][0])
    slab = slab.at[sp_off + 4, 0:out_dims].set(params["b3"][0])

    return dict(slab=slab, D=D, H=H, out_dims=out_dims,
                w2_off=w2_off, w3_off=w3_off, sp_off=sp_off)


def regressor_forward(x, packed):
    """x: (B, D) float32. packed: output of pack_params. Returns (B, out_dims)."""
    B = x.shape[0]
    out_dims = packed["out_dims"]
    kernel = _make_kernel(packed["D"], packed["H"], out_dims,
                          packed["w2_off"], packed["w3_off"], packed["sp_off"])
    vmem = pl.BlockSpec(memory_space=pltpu.MemorySpace.VMEM)

    return pl.pallas_call(
        kernel,
        out_shape=jax.ShapeDtypeStruct((B, out_dims), jnp.float32),
        in_specs=[vmem, vmem],
        out_specs=vmem,
    )(x, packed["slab"])


def init_params(key, linear_input_dims, output_dims):
    """Deterministic synthetic parameters (shapes match the nn.Module)."""
    H = linear_input_dims // 2
    ks = jax.random.split(key, 6)

    def lin(k, fan_in, fan_out):
        bound = 1.0 / jnp.sqrt(fan_in)
        kw, kb = jax.random.split(k)
        w = jax.random.uniform(kw, (fan_in, fan_out), jnp.float32, -bound, bound)
        b = jax.random.uniform(kb, (1, fan_out), jnp.float32, -bound, bound)
        return w, b

    w1, b1 = lin(ks[0], linear_input_dims, H)
    w2, b2 = lin(ks[1], H, H)
    w3, b3 = lin(ks[2], H, output_dims)

    return dict(
        w1=w1, b1=b1,
        gamma1=jnp.ones((1, H), jnp.float32), beta1=jnp.zeros((1, H), jnp.float32),
        w2=w2, b2=b2,
        gamma2=jnp.ones((1, H), jnp.float32), beta2=jnp.zeros((1, H), jnp.float32),
        w3=w3, b3=b3,
    )


def reference_forward(x, p):
    """Pure-JAX reference keeping the full module math (including b1/b2)."""
    def bn(h, g, b):
        m = jnp.mean(h, axis=0, keepdims=True)
        v = jnp.mean((h - m) ** 2, axis=0, keepdims=True)
        return (h - m) / jnp.sqrt(v + EPS) * g + b

    def gelu(x):
        return 0.5 * x * (1.0 + jax.lax.erf(x * INV_SQRT2))

    h = gelu(bn(x @ p["w1"] + p["b1"], p["gamma1"], p["beta1"]))
    h = gelu(bn(h @ p["w2"] + p["b2"], p["gamma2"], p["beta2"]))
    return h @ p["w3"] + p["b3"]


if __name__ == "__main__":
    B = 8                     # batch
    linear_input_dims = 32    # D
    output_dims = 8

    key = jax.random.PRNGKey(0)
    kx, kp = jax.random.split(key)
    x = jax.random.normal(kx, (B, linear_input_dims), jnp.float32)
    params = init_params(kp, linear_input_dims, output_dims)
    packed = pack_params(params)

    out = regressor_forward(x, packed)
    out = jax.block_until_ready(out)

    ref = reference_forward(x, params)
    assert out.shape == (B, output_dims)
    assert jnp.allclose(out, ref, atol=2e-3, rtol=2e-3), "mismatch vs reference"

    print("KERNEL_OK")
</pallas_src>

<mosaic_0001>
module attributes {stable_mosaic.version = 11 : i64} {
  func.func @kernel(%arg0: memref<8x32xf32, #tpu.memory_space<vmem>>, %arg1: memref<72x128xf32, #tpu.memory_space<vmem>>, %arg2: memref<8x8xf32, #tpu.memory_space<vmem>>) attributes {dimension_semantics = [], scalar_prefetch = 0 : i64, scratch_operands = 0 : i64, tpu.core_type = #tpu.core_type<tc>} {
    %c0 = arith.constant 0 : index
    %c0_0 = arith.constant 0 : index
    %0 = vector.load %arg1[%c0, %c0_0] : memref<72x128xf32, #tpu.memory_space<vmem>>, vector<32x16xf32>
    %c32 = arith.constant 32 : index
    %c0_1 = arith.constant 0 : index
    %1 = vector.load %arg1[%c32, %c0_1] : memref<72x128xf32, #tpu.memory_space<vmem>>, vector<16x16xf32>
    %c48 = arith.constant 48 : index
    %c0_2 = arith.constant 0 : index
    %2 = vector.load %arg1[%c48, %c0_2] : memref<72x128xf32, #tpu.memory_space<vmem>>, vector<16x8xf32>
    %c64 = arith.constant 64 : index
    %c0_3 = arith.constant 0 : index
    %3 = vector.load %arg1[%c64, %c0_3] : memref<72x128xf32, #tpu.memory_space<vmem>>, vector<1x16xf32>
    %c65 = arith.constant 65 : index
    %c0_4 = arith.constant 0 : index
    %4 = vector.load %arg1[%c65, %c0_4] : memref<72x128xf32, #tpu.memory_space<vmem>>, vector<1x16xf32>
    %c66 = arith.constant 66 : index
    %c0_5 = arith.constant 0 : index
    %5 = vector.load %arg1[%c66, %c0_5] : memref<72x128xf32, #tpu.memory_space<vmem>>, vector<1x16xf32>
    %c67 = arith.constant 67 : index
    %c0_6 = arith.constant 0 : index
    %6 = vector.load %arg1[%c67, %c0_6] : memref<72x128xf32, #tpu.memory_space<vmem>>, vector<1x16xf32>
    %c68 = arith.constant 68 : index
    %c0_7 = arith.constant 0 : index
    %7 = vector.load %arg1[%c68, %c0_7] : memref<72x128xf32, #tpu.memory_space<vmem>>, vector<1x8xf32>
    %c0_8 = arith.constant 0 : index
    %c0_9 = arith.constant 0 : index
    %8 = vector.load %arg0[%c0_8, %c0_9] : memref<8x32xf32, #tpu.memory_space<vmem>>, vector<8x32xf32>
    %cst = arith.constant dense<0.000000e+00> : vector<8x16xf32>
    %9 = tpu.matmul %8, %0, %cst {dimension_numbers = #tpu.dot_dimension_numbers<[1], [0], [0], [1], [0, 0, 1, 1], [], []>} : vector<8x32xf32>, vector<32x16xf32>, vector<8x16xf32> -> vector<8x16xf32>
    %cst_10 = arith.constant dense<0.000000e+00> : vector<16xf32>
    %10 = vector.multi_reduction <add>, %9, %cst_10 [0] : vector<8x16xf32> to vector<16xf32>
    %11 = vector.shape_cast %10 : vector<16xf32> to vector<1x16xf32>
    %cst_11 = arith.constant 8.000000e+00 : f32
    %12 = vector.broadcast %cst_11 : f32 to vector<1x16xf32>
    %13 = arith.divf %11, %12 : vector<1x16xf32>
    %14 = vector.broadcast %13 : vector<1x16xf32> to vector<8x16xf32>
    %15 = arith.subf %9, %14 : vector<8x16xf32>
    %16 = arith.mulf %15, %15 : vector<8x16xf32>
    %cst_12 = arith.constant dense<0.000000e+00> : vector<16xf32>
    %17 = vector.multi_reduction <add>, %16, %cst_12 [0] : vector<8x16xf32> to vector<16xf32>
    %18 = vector.shape_cast %17 : vector<16xf32> to vector<1x16xf32>
    %cst_13 = arith.constant 8.000000e+00 : f32
    %19 = vector.broadcast %cst_13 : f32 to vector<1x16xf32>
    %20 = arith.divf %18, %19 : vector<1x16xf32>
    %cst_14 = arith.constant 9.99999974E-6 : f32
    %21 = vector.broadcast %cst_14 : f32 to vector<1x16xf32>
    %22 = arith.addf %20, %21 : vector<1x16xf32>
    %23 = math.rsqrt %22 : vector<1x16xf32>
    %24 = arith.mulf %3, %23 : vector<1x16xf32>
    %25 = vector.broadcast %24 : vector<1x16xf32> to vector<8x16xf32>
    %26 = arith.mulf %15, %25 : vector<8x16xf32>
    %27 = vector.broadcast %4 : vector<1x16xf32> to vector<8x16xf32>
    %28 = arith.addf %26, %27 : vector<8x16xf32>
    %cst_15 = arith.constant 5.000000e-01 : f32
    %29 = vector.broadcast %cst_15 : f32 to vector<8x16xf32>
    %30 = arith.mulf %29, %28 : vector<8x16xf32>
    %cst_16 = arith.constant 0.707106769 : f32
    %31 = vector.broadcast %cst_16 : f32 to vector<8x16xf32>
    %32 = arith.mulf %28, %31 : vector<8x16xf32>
    %33 = math.erf %32 : vector<8x16xf32>
    %cst_17 = arith.constant 1.000000e+00 : f32
    %34 = vector.broadcast %cst_17 : f32 to vector<8x16xf32>
    %35 = arith.addf %34, %33 : vector<8x16xf32>
    %36 = arith.mulf %30, %35 : vector<8x16xf32>
    %cst_18 = arith.constant dense<0.000000e+00> : vector<8x16xf32>
    %37 = tpu.matmul %36, %1, %cst_18 {dimension_numbers = #tpu.dot_dimension_numbers<[1], [0], [0], [1], [0, 0, 1, 1], [], []>} : vector<8x16xf32>, vector<16x16xf32>, vector<8x16xf32> -> vector<8x16xf32>
    %cst_19 = arith.constant dense<0.000000e+00> : vector<16xf32>
    %38 = vector.multi_reduction <add>, %37, %cst_19 [0] : vector<8x16xf32> to vector<16xf32>
    %39 = vector.shape_cast %38 : vector<16xf32> to vector<1x16xf32>
    %cst_20 = arith.constant 8.000000e+00 : f32
    %40 = vector.broadcast %cst_20 : f32 to vector<1x16xf32>
    %41 = arith.divf %39, %40 : vector<1x16xf32>
    %42 = vector.broadcast %41 : vector<1x16xf32> to vector<8x16xf32>
    %43 = arith.subf %37, %42 : vector<8x16xf32>
    %44 = arith.mulf %43, %43 : vector<8x16xf32>
    %cst_21 = arith.constant dense<0.000000e+00> : vector<16xf32>
    %45 = vector.multi_reduction <add>, %44, %cst_21 [0] : vector<8x16xf32> to vector<16xf32>
    %46 = vector.shape_cast %45 : vector<16xf32> to vector<1x16xf32>
    %cst_22 = arith.constant 8.000000e+00 : f32
    %47 = vector.broadcast %cst_22 : f32 to vector<1x16xf32>
    %48 = arith.divf %46, %47 : vector<1x16xf32>
    %cst_23 = arith.constant 9.99999974E-6 : f32
    %49 = vector.broadcast %cst_23 : f32 to vector<1x16xf32>
    %50 = arith.addf %48, %49 : vector<1x16xf32>
    %51 = math.rsqrt %50 : vector<1x16xf32>
    %52 = arith.mulf %5, %51 : vector<1x16xf32>
    %53 = vector.broadcast %52 : vector<1x16xf32> to vector<8x16xf32>
    %54 = arith.mulf %43, %53 : vector<8x16xf32>
    %55 = vector.broadcast %6 : vector<1x16xf32> to vector<8x16xf32>
    %56 = arith.addf %54, %55 : vector<8x16xf32>
    %cst_24 = arith.constant 5.000000e-01 : f32
    %57 = vector.broadcast %cst_24 : f32 to vector<8x16xf32>
    %58 = arith.mulf %57, %56 : vector<8x16xf32>
    %cst_25 = arith.constant 0.707106769 : f32
    %59 = vector.broadcast %cst_25 : f32 to vector<8x16xf32>
    %60 = arith.mulf %56, %59 : vector<8x16xf32>
    %61 = math.erf %60 : vector<8x16xf32>
    %cst_26 = arith.constant 1.000000e+00 : f32
    %62 = vector.broadcast %cst_26 : f32 to vector<8x16xf32>
    %63 = arith.addf %62, %61 : vector<8x16xf32>
    %64 = arith.mulf %58, %63 : vector<8x16xf32>
    %cst_27 = arith.constant dense<0.000000e+00> : vector<8x8xf32>
    %65 = tpu.matmul %64, %2, %cst_27 {dimension_numbers = #tpu.dot_dimension_numbers<[1], [0], [0], [1], [0, 0, 1, 1], [], []>} : vector<8x16xf32>, vector<16x8xf32>, vector<8x8xf32> -> vector<8x8xf32>
    %66 = vector.broadcast %7 : vector<1x8xf32> to vector<8x8xf32>
    %67 = arith.addf %65, %66 : vector<8x8xf32>
    %c0_28 = arith.constant 0 : index
    %c0_29 = arith.constant 0 : index
    %68 = vector.load %arg2[%c0_28, %c0_29] : memref<8x8xf32, #tpu.memory_space<vmem>>, vector<8x8xf32>
    tpu.vector_store %arg2[%c0_28, %c0_29], %67 {strides = array<i32>} : memref<8x8xf32, #tpu.memory_space<vmem>>, vector<8x8xf32>,
    return
  }
}

</mosaic_0001>

<llo_original>
// kernel: tpu_custom_call.1
$region0: #{tpu_custom_call.1}
  #allocation0 [shape = 'u32[]', space=smem, size = 0x4, offset = 0x4, fixed_abs, tag = 'smem constant byte address 0x4 - core index']
  #allocation1 [shape = 'u32[144,128]{1,0:T(1,128)}', space=vmem, size = 0x12000, scoped, tag = 'internal scratch']
  %s0 = inlined_call_operand.hbm [shape: f32[8,32], index: 0, kind: input, shape index: {}]
  %s1 = inlined_call_operand.hbm [shape: f32[72,128], index: 1, kind: input, shape index: {}]
  %s2 = inlined_call_operand.hbm [shape: f32[8,8], index: 2, kind: output, shape index: {}]
  %s3 = sld [smem:[#allocation0]]
  $region26: #{tpu_custom_call.1} parent=0
    _
  %s5 = ssub.s32 1, %s3
  %s6 = scalar_select 0, %s5, %s3
  $region1: #{tpu_custom_call.1} parent=0
    #allocation2 [shape = 'u8[4096]{0}', space=vmem, size = 0x1000, scoped, tag = 'input window, operand 0, single buffered']
    #allocation3 [shape = 's32[1]{0}', space=sflag, size = 0x4, scoped, tag = 'scoped memory for tpu_custom_call.1']
    #allocation4 [shape = 's32[1]{0}', space=sflag, size = 0x4, scoped, tag = 'scoped memory for tpu_custom_call.1']
    #allocation5 [shape = 'u8[36864]{0}', space=vmem, size = 0x9000, scoped, tag = 'input window, operand 1, single buffered']
    #allocation6 [shape = 's32[1]{0}', space=sflag, size = 0x4, scoped, tag = 'scoped memory for tpu_custom_call.1']
    #allocation7 [shape = 'u8[4096]{0}', space=vmem, size = 0x1000, scoped, tag = 'output window, operand 0, single buffered']
    %7 = vsyncpa [#allocation3], 0
    %8 = vsyncpa [#allocation6], 0
    %9 = vsyncpa [#allocation4], 0
    // Predicated region
    $region2: #{tpu_custom_call.1} parent=1 // pred_check
      _
    $region3: #{tpu_custom_call.1} parent=1 // pred_check_branch
      %11 = sbr.rel (0) target = $region5
    $region4: #{tpu_custom_call.1} parent=1 // pred_region
      %s13 = ssub.s32 128, 128
      %14 = vsyncadd [#allocation3], %s13
      %s16 = sshll.u32 [#allocation2], 4
      %s17 = int_to_ptr.vmem [resolvable:$true] %s16
      %19 = dma.hbm_to_vmem [thread:$0]  %s0, 128, %s17, [#allocation3]
    $region5: #{tpu_custom_call.1} parent=1 // pred_fallthru
      _
    // Predicated region
    $region6: #{tpu_custom_call.1} parent=1 // pred_check
      _
    $region7: #{tpu_custom_call.1} parent=1 // pred_check_branch
      %21 = sbr.rel (0) target = $region9
    $region8: #{tpu_custom_call.1} parent=1 // pred_region
      %s23 = ssub.s32 1152, 1152
      %24 = vsyncadd [#allocation6], %s23
      %s25 = sshll.u32 [#allocation5], 4
      %s26 = int_to_ptr.vmem [resolvable:$true] %s25
      %31 = dma.hbm_to_vmem [thread:$0]  %s1, 1152, %s26, [#allocation6], 128, 128, 8
    $region9: #{tpu_custom_call.1} parent=1 // pred_fallthru
      _
    // Predicated region
    $region10: #{tpu_custom_call.1} parent=1 // pred_check
      _
    $region11: #{tpu_custom_call.1} parent=1 // pred_check_branch
      %33 = sbr.rel (0) target = $region13
    $region12: #{tpu_custom_call.1} parent=1 // pred_region
      %34 = dma.done [#allocation3], 128
    $region13: #{tpu_custom_call.1} parent=1 // pred_fallthru
      _
    // Predicated region
    $region14: #{tpu_custom_call.1} parent=1 // pred_check
      _
    $region15: #{tpu_custom_call.1} parent=1 // pred_check_branch
      %36 = sbr.rel (0) target = $region17
    $region16: #{tpu_custom_call.1} parent=1 // pred_region
      %37 = dma.done [#allocation6], 1152
    $region17: #{tpu_custom_call.1} parent=1 // pred_fallthru
      _
    %v38 = vld [vmem:[#allocation5] sm:$0xff]
    %v39 = vld [vmem:[#allocation5 + $0x8] sm:$0xff]
    %v40 = vld [vmem:[#allocation5 + $0x10] sm:$0xff]
    %v41 = vld [vmem:[#allocation5 + $0x18] sm:$0xff]
    %v42 = vld [vmem:[#allocation5 + $0x20] sm:$0xff]
    %v43 = vld [vmem:[#allocation5 + $0x28] sm:$0xff]
    %v44 = vld [vmem:[#allocation5 + $0x30] sm:$0xff]
    %v45 = vld [vmem:[#allocation5 + $0x38] sm:$0xff]
    %v46 = vld [vmem:[#allocation5 + $0x40] sm:$0x1]
    %v47 = vld [vmem:[#allocation5 + $0x41] sm:$0x1]
    %v48 = vld [vmem:[#allocation5 + $0x42] sm:$0x1]
    %v49 = vld [vmem:[#allocation5 + $0x43] sm:$0x1]
    %v50 = vld [vmem:[#allocation5 + $0x44] sm:$0x1]
    %v51 = vld [vmem:[#allocation2] sm:$0xff]
    %vm52 = vcmask 261120
    %v54 = vsel %vm52, %v51, 0
    %56 = vmatprep.subr.mxu0 0.0
    %57 = vmatpush1.msra.mxu0 %v38
    %58 = vmatprep.subr.mxu0 0.0
    %59 = vmatpush1.msra.mxu0 %v39
    %60 = vmatprep.subr.mxu0 0.0
    %61 = vmatpush1.msra.mxu0 %v40
    %62 = vmatprep.subr.mxu0 0.0
    %63 = vmatpush1.msra.mxu0 %v41
    %64 = vmatprep.subr.mxu0 0.0
    %65 = vmatpush1.msra.mxu0 0.0
    %66 = vmatprep.subr.mxu0 0.0
    %67 = vmatpush1.msra.mxu0 0.0
    %68 = vmatprep.subr.mxu0 0.0
    %69 = vmatpush1.msra.mxu0 0.0
    %70 = vmatprep.subr.mxu0 0.0
    %71 = vmatpush1.msra.mxu0 0.0
    %72 = vmatprep.subr.mxu0 0.0
    %73 = vmatpush1.msra.mxu0 0.0
    %74 = vmatprep.subr.mxu0 0.0
    %75 = vmatpush1.msra.mxu0 0.0
    %76 = vmatprep.subr.mxu0 0.0
    %77 = vmatpush1.msra.mxu0 0.0
    %78 = vmatprep.subr.mxu0 0.0
    %79 = vmatpush1.msra.mxu0 0.0
    %80 = vmatprep.subr.mxu0 0.0
    %81 = vmatpush1.msra.mxu0 0.0
    %82 = vmatprep.subr.mxu0 0.0
    %83 = vmatpush1.msra.mxu0 0.0
    %84 = vmatprep.subr.mxu0 0.0
    %85 = vmatpush1.msra.mxu0 0.0
    %86 = vmatprep.subr.mxu0 0.0
    %87 = vmatpush1.msra.mxu0 0.0
    %88 = vmatprep.subr.mxu0 0.0
    %89 = vmatpush1.msra.mxu0 0.0
    %90 = vmatprep.subr.mxu0 0.0
    %91 = vmatpush1.msra.mxu0 0.0
    %92 = vmatprep.subr.mxu0 0.0
    %93 = vmatpush1.msra.mxu0 0.0
    %94 = vmatprep.subr.mxu0 0.0
    %95 = vmatpush1.msra.mxu0 0.0
    %96 = vmatprep.subr.mxu0 0.0
    %97 = vmatpush1.msra.mxu0 0.0
    %98 = vmatprep.subr.mxu0 0.0
    %99 = vmatpush1.msra.mxu0 0.0
    %100 = vmatprep.subr.mxu0 0.0
    %101 = vmatpush1.msra.mxu0 0.0
    %102 = vmatprep.subr.mxu0 0.0
    %103 = vmatpush1.msra.mxu0 0.0
    %104 = vmatprep.subr.mxu0 0.0
    %105 = vmatpush1.msra.mxu0 0.0
    %106 = vmatprep.subr.mxu0 0.0
    %107 = vmatpush1.msra.mxu0 0.0
    %108 = vmatprep.subr.mxu0 0.0
    %109 = vmatpush1.msra.mxu0 0.0
    %110 = vmatprep.subr.mxu0 0.0
    %111 = vmatpush1.msra.mxu0 0.0
    %112 = vmatprep.subr.mxu0 0.0
    %113 = vmatpush1.msra.mxu0 0.0
    %114 = vmatprep.subr.mxu0 0.0
    %115 = vmatpush1.msra.mxu0 0.0
    %116 = vmatprep.subr.mxu0 0.0
    %117 = vmatpush1.msra.mxu0 0.0
    %118 = vmatprep.subr.mxu0 0.0
    %119 = vmatpush1.msra.mxu0 0.0
    %120 = vmatprep.mubr.f32.mxu0 0.0
    %121 = vmatmul.mubr.f32.gmra.mrb[0].mxu0 %v54
    %v122 = vpop.f32.mrb[0].mxu0
    %v123 = vadd.f32 0.0, %v122
    %v124 = vpop.f32.mrb[0].mxu0
    %125 = vdwg.mxu0
    %vm126 = vcmask 130048
    %v127 = vsel %vm126, %v123, 0.0
    %v128 = vrot.slane %v127, 4
    %v129 = vadd.f32 %v127, %v128
    %v130 = vrot.slane %v129, 2
    %v131 = vadd.f32 %v129, %v130
    %v132 = vrot.slane %v131, 1
    %v133 = vadd.f32 %v131, %v132
    %v134 = vrcp.pop 8.0
    %v135 = vmul.f32 %v133, %v134
    %v136 = vsub.f32 %v123, %v135
    %v137 = vmul.f32 %v136, %v136
    %v138 = vsel %vm126, %v137, 0.0
    %v139 = vrot.slane %v138, 4
    %v140 = vadd.f32 %v138, %v139
    %v141 = vrot.slane %v140, 2
    %v142 = vadd.f32 %v140, %v141
    %v143 = vrot.slane %v142, 1
    %v144 = vadd.f32 %v142, %v143
    %v145 = vmul.f32 %v144, %v134
    %v146 = vadd.f32 %v145, 1e-05
    %v147 = vrsqrt.pop %v146
    %v148 = vmul.f32 %v46, %v147
    %v149 = vlaneseq
    %v150 = vshrl.u32 %v149, 7
    %v151 = vsub.s32 0, %v150
    %v152 = vrot.slane %v148, %v151
    %v153 = vmul.f32 %v136, %v152
    %v154 = vlaneseq
    %v155 = vshrl.u32 %v154, 7
    %v156 = vsub.s32 0, %v155
    %v157 = vrot.slane %v47, %v156
    %v158 = vadd.f32 %v153, %v157
    %v159 = vmul.f32 %v158, 0.5
    %v160 = vmul.f32 %v158, 0.70710677
    %v161 = verf.f32.pop %v160
    %v162 = vadd.f32 %v161, 1.0
    %v163 = vmul.f32 %v159, %v162
    %v165 = vsel %vm126, %v163, 0
    %167 = vmatprep.subr.mxu0 0.0
    %168 = vmatpush1.msra.mxu0 %v42
    %169 = vmatprep.subr.mxu0 0.0
    %170 = vmatpush1.msra.mxu0 %v43
    %171 = vmatprep.subr.mxu0 0.0
    %172 = vmatpush1.msra.mxu0 0.0
    %173 = vmatprep.subr.mxu0 0.0
    %174 = vmatpush1.msra.mxu0 0.0
    %175 = vmatprep.subr.mxu0 0.0
    %176 = vmatpush1.msra.mxu0 0.0
    %177 = vmatprep.subr.mxu0 0.0
    %178 = vmatpush1.msra.mxu0 0.0
    %179 = vmatprep.subr.mxu0 0.0
    %180 = vmatpush1.msra.mxu0 0.0
    %181 = vmatprep.subr.mxu0 0.0
    %182 = vmatpush1.msra.mxu0 0.0
    %183 = vmatprep.subr.mxu0 0.0
    %184 = vmatpush1.msra.mxu0 0.0
    %185 = vmatprep.subr.mxu0 0.0
    %186 = vmatpush1.msra.mxu0 0.0
    %187 = vmatprep.subr.mxu0 0.0
    %188 = vmatpush1.msra.mxu0 0.0
    %189 = vmatprep.subr.mxu0 0.0
    %190 = vmatpush1.msra.mxu0 0.0
    %191 = vmatprep.subr.mxu0 0.0
    %192 = vmatpush1.msra.mxu0 0.0
    %193 = vmatprep.subr.mxu0 0.0
    %194 = vmatpush1.msra.mxu0 0.0
    %195 = vmatprep.subr.mxu0 0.0
    %196 = vmatpush1.msra.mxu0 0.0
    %197 = vmatprep.subr.mxu0 0.0
    %198 = vmatpush1.msra.mxu0 0.0
    %199 = vmatprep.subr.mxu0 0.0
    %200 = vmatpush1.msra.mxu0 0.0
    %201 = vmatprep.subr.mxu0 0.0
    %202 = vmatpush1.msra.mxu0 0.0
    %203 = vmatprep.subr.mxu0 0.0
    %204 = vmatpush1.msra.mxu0 0.0
    %205 = vmatprep.subr.mxu0 0.0
    %206 = vmatpush1.msra.mxu0 0.0
    %207 = vmatprep.subr.mxu0 0.0
    %208 = vmatpush1.msra.mxu0 0.0
    %209 = vmatprep.subr.mxu0 0.0
    %210 = vmatpush1.msra.mxu0 0.0
    %211 = vmatprep.subr.mxu0 0.0
    %212 = vmatpush1.msra.mxu0 0.0
    %213 = vmatprep.subr.mxu0 0.0
    %214 = vmatpush1.msra.mxu0 0.0
    %215 = vmatprep.subr.mxu0 0.0
    %216 = vmatpush1.msra.mxu0 0.0
    %217 = vmatprep.subr.mxu0 0.0
    %218 = vmatpush1.msra.mxu0 0.0
    %219 = vmatprep.subr.mxu0 0.0
    %220 = vmatpush1.msra.mxu0 0.0
    %221 = vmatprep.subr.mxu0 0.0
    %222 = vmatpush1.msra.mxu0 0.0
    %223 = vmatprep.subr.mxu0 0.0
    %224 = vmatpush1.msra.mxu0 0.0
    %225 = vmatprep.subr.mxu0 0.0
    %226 = vmatpush1.msra.mxu0 0.0
    %227 = vmatprep.subr.mxu0 0.0
    %228 = vmatpush1.msra.mxu0 0.0
    %229 = vmatprep.subr.mxu0 0.0
    %230 = vmatpush1.msra.mxu0 0.0
    %231 = vmatprep.mubr.f32.mxu0 0.0
    %232 = vmatmul.mubr.f32.gmra.mrb[0].mxu0 %v165
    %v233 = vpop.f32.mrb[0].mxu0
    %v234 = vadd.f32 0.0, %v233
    %v235 = vpop.f32.mrb[0].mxu0
    %236 = vdwg.mxu0
    %v237 = vsel %vm126, %v234, 0.0
    %v238 = vrot.slane %v237, 4
    %v239 = vadd.f32 %v237, %v238
    %v240 = vrot.slane %v239, 2
    %v241 = vadd.f32 %v239, %v240
    %v242 = vrot.slane %v241, 1
    %v243 = vadd.f32 %v241, %v242
    %v244 = vmul.f32 %v243, %v134
    %v245 = vsub.f32 %v234, %v244
    %v246 = vmul.f32 %v245, %v245
    %v247 = vsel %vm126, %v246, 0.0
    %v248 = vrot.slane %v247, 4
    %v249 = vadd.f32 %v247, %v248
    %v250 = vrot.slane %v249, 2
    %v251 = vadd.f32 %v249, %v250
    %v252 = vrot.slane %v251, 1
    %v253 = vadd.f32 %v251, %v252
    %v254 = vmul.f32 %v253, %v134
    %v255 = vadd.f32 %v254, 1e-05
    %v256 = vrsqrt.pop %v255
    %v257 = vmul.f32 %v48, %v256
    %v258 = vlaneseq
    %v259 = vshrl.u32 %v258, 7
    %v260 = vsub.s32 0, %v259
    %v261 = vrot.slane %v257, %v260
    %v262 = vmul.f32 %v245, %v261
    %v263 = vlaneseq
    %v264 = vshrl.u32 %v263, 7
    %v265 = vsub.s32 0, %v264
    %v266 = vrot.slane %v49, %v265
    %v267 = vadd.f32 %v262, %v266
    %v268 = vmul.f32 %v267, 0.5
    %v269 = vmul.f32 %v267, 0.70710677
    %v270 = verf.f32.pop %v269
    %v271 = vadd.f32 %v270, 1.0
    %v272 = vmul.f32 %v268, %v271
    %v273 = vlaneseq
    %v274 = vshrl.u32 %v273, 7
    %v275 = vsub.s32 0, %v274
    %v276 = vrot.slane %v50, %v275
    %v278 = vsel %vm126, %v272, 0
    %280 = vmatprep.subr.mxu0 0.0
    %281 = vmatpush1.msra.mxu0 %v44
    %282 = vmatprep.subr.mxu0 0.0
    %283 = vmatpush1.msra.mxu0 %v45
    %284 = vmatprep.subr.mxu0 0.0
    %285 = vmatpush1.msra.mxu0 0.0
    %286 = vmatprep.subr.mxu0 0.0
    %287 = vmatpush1.msra.mxu0 0.0
    %288 = vmatprep.subr.mxu0 0.0
    %289 = vmatpush1.msra.mxu0 0.0
    %290 = vmatprep.subr.mxu0 0.0
    %291 = vmatpush1.msra.mxu0 0.0
    %292 = vmatprep.subr.mxu0 0.0
    %293 = vmatpush1.msra.mxu0 0.0
    %294 = vmatprep.subr.mxu0 0.0
    %295 = vmatpush1.msra.mxu0 0.0
    %296 = vmatprep.subr.mxu0 0.0
    %297 = vmatpush1.msra.mxu0 0.0
    %298 = vmatprep.subr.mxu0 0.0
    %299 = vmatpush1.msra.mxu0 0.0
    %300 = vmatprep.subr.mxu0 0.0
    %301 = vmatpush1.msra.mxu0 0.0
    %302 = vmatprep.subr.mxu0 0.0
    %303 = vmatpush1.msra.mxu0 0.0
    %304 = vmatprep.subr.mxu0 0.0
    %305 = vmatpush1.msra.mxu0 0.0
    %306 = vmatprep.subr.mxu0 0.0
    %307 = vmatpush1.msra.mxu0 0.0
    %308 = vmatprep.subr.mxu0 0.0
    %309 = vmatpush1.msra.mxu0 0.0
    %310 = vmatprep.subr.mxu0 0.0
    %311 = vmatpush1.msra.mxu0 0.0
    %312 = vmatprep.subr.mxu0 0.0
    %313 = vmatpush1.msra.mxu0 0.0
    %314 = vmatprep.subr.mxu0 0.0
    %315 = vmatpush1.msra.mxu0 0.0
    %316 = vmatprep.subr.mxu0 0.0
    %317 = vmatpush1.msra.mxu0 0.0
    %318 = vmatprep.subr.mxu0 0.0
    %319 = vmatpush1.msra.mxu0 0.0
    %320 = vmatprep.subr.mxu0 0.0
    %321 = vmatpush1.msra.mxu0 0.0
    %322 = vmatprep.subr.mxu0 0.0
    %323 = vmatpush1.msra.mxu0 0.0
    %324 = vmatprep.subr.mxu0 0.0
    %325 = vmatpush1.msra.mxu0 0.0
    %326 = vmatprep.subr.mxu0 0.0
    %327 = vmatpush1.msra.mxu0 0.0
    %328 = vmatprep.subr.mxu0 0.0
    %329 = vmatpush1.msra.mxu0 0.0
    %330 = vmatprep.subr.mxu0 0.0
    %331 = vmatpush1.msra.mxu0 0.0
    %332 = vmatprep.subr.mxu0 0.0
    %333 = vmatpush1.msra.mxu0 0.0
    %334 = vmatprep.subr.mxu0 0.0
    %335 = vmatpush1.msra.mxu0 0.0
    %336 = vmatprep.subr.mxu0 0.0
    %337 = vmatpush1.msra.mxu0 0.0
    %338 = vmatprep.subr.mxu0 0.0
    %339 = vmatpush1.msra.mxu0 0.0
    %340 = vmatprep.subr.mxu0 0.0
    %341 = vmatpush1.msra.mxu0 0.0
    %342 = vmatprep.subr.mxu0 0.0
    %343 = vmatpush1.msra.mxu0 0.0
    %344 = vmatprep.mubr.f32.mxu0 0.0
    %345 = vmatmul.mubr.f32.gmra.mrb[0].mxu0 %v278
    %v346 = vpop.f32.mrb[0].mxu0
    %v347 = vadd.f32 %v276, %v346
    %v348 = vpop.f32.mrb[0].mxu0
    %349 = vdwg.mxu0
    %vm350 = vcmask 64512
    %351 = vst.msk [vmem:[#allocation7] sm:$0xff] %vm350, %v347
    // Predicated region
    $region18: #{tpu_custom_call.1} parent=1 // pred_check
      _
    $region19: #{tpu_custom_call.1} parent=1 // pred_check_branch
      %353 = sbr.rel (0) target = $region21
    $region20: #{tpu_custom_call.1} parent=1 // pred_region
      %s355 = ssub.s32 128, 128
      %356 = vsyncadd [#allocation4], %s355
      %s358 = sshll.u32 [#allocation7], 4
      %s359 = int_to_ptr.vmem [resolvable:$true] %s358
      %361 = dma.vmem_to_hbm [thread:$0]  %s359, 128, %s2, [#allocation4]
    $region21: #{tpu_custom_call.1} parent=1 // pred_fallthru
      _
    // Predicated region
    $region22: #{tpu_custom_call.1} parent=1 // pred_check
      _
    $region23: #{tpu_custom_call.1} parent=1 // pred_check_branch
      %363 = sbr.rel (0) target = $region25
    $region24: #{tpu_custom_call.1} parent=1 // pred_region
      %364 = dma.done [#allocation4], 128
    $region25: #{tpu_custom_call.1} parent=1 // pred_fallthru
      _
    %365 = vsyncpa [#allocation3], 1
    %366 = vsyncpa [#allocation6], 1
    %367 = vsyncpa [#allocation4], 1

</llo_original>
